<compile_context>
chip_gen: v7x
topology: tpu7x:2x2x1
jax: 0.10.0
libtpu: 0.0.40
codegen_flags: <defaults>
</compile_context>

<pallas_src>
import jax
import jax.numpy as jnp
from jax.experimental import pallas as pl
from jax.experimental.pallas import tpu as pltpu


def _add_kernel(a_ref, b_ref, o_ref):
    # Hot path: elementwise add on the whole VMEM tile (VPU).
    o_ref[...] = a_ref[...] + b_ref[...]


def pallas_add(a: jax.Array, b: jax.Array) -> jax.Array:
    """Elementwise a + b with a lane-dense (…, 128) slab layout."""
    assert a.shape == b.shape and a.dtype == b.dtype
    orig_shape = a.shape
    total = a.size

    if total % 128 == 0:
        # Lane-dense: last dim is exactly 128 lanes (31,360 = 245 * 128 for
        # the module's [1, 640, 7, 7] input). Reshape is free: buffer is
        # contiguous.
        slab_shape = (total // 128, 128)
    else:
        # Fallback for shapes whose element count is not lane-aligned.
        slab_shape = (total // orig_shape[-1], orig_shape[-1])

    a2 = a.reshape(slab_shape)
    b2 = b.reshape(slab_shape)

    out2 = pl.pallas_call(
        _add_kernel,
        out_shape=jax.ShapeDtypeStruct(slab_shape, a.dtype),
        in_specs=[
            pl.BlockSpec(memory_space=pltpu.MemorySpace.VMEM),
            pl.BlockSpec(memory_space=pltpu.MemorySpace.VMEM),
        ],
        out_specs=pl.BlockSpec(memory_space=pltpu.MemorySpace.VMEM),
        # Output reuses the first input's buffer (in-place add).
        input_output_aliases={0: 0},
    )(a2, b2)

    return out2.reshape(orig_shape)


if __name__ == "__main__":
    key = jax.random.PRNGKey(0)
    k1, k2 = jax.random.split(key)
    # Shapes consistent with the module's forward (NCHW add).
    shape = (1, 640, 7, 7)
    x1052 = jax.random.normal(k1, shape, dtype=jnp.float32)
    x1037 = jax.random.normal(k2, shape, dtype=jnp.float32)

    out = pallas_add(x1052, x1037)
    jax.block_until_ready(out)

    # Verify against plain JAX reference.
    ref = x1052 + x1037
    assert out.shape == ref.shape
    assert jnp.allclose(out, ref, atol=1e-6, rtol=1e-6)
    print("KERNEL_OK")
</pallas_src>

<mosaic_0001>
module attributes {stable_mosaic.version = 11 : i64} {
  func.func @_add_kernel(%arg0: memref<245x128xf32, #tpu.memory_space<vmem>>, %arg1: memref<245x128xf32, #tpu.memory_space<vmem>>, %arg2: memref<245x128xf32, #tpu.memory_space<vmem>>) attributes {dimension_semantics = [], scalar_prefetch = 0 : i64, scratch_operands = 0 : i64, tpu.core_type = #tpu.core_type<tc>} {
    %c0 = arith.constant 0 : index
    %c0_0 = arith.constant 0 : index
    %0 = vector.load %arg0[%c0, %c0_0] : memref<245x128xf32, #tpu.memory_space<vmem>>, vector<245x128xf32>
    %c0_1 = arith.constant 0 : index
    %c0_2 = arith.constant 0 : index
    %1 = vector.load %arg1[%c0_1, %c0_2] : memref<245x128xf32, #tpu.memory_space<vmem>>, vector<245x128xf32>
    %2 = arith.addf %0, %1 : vector<245x128xf32>
    %c0_3 = arith.constant 0 : index
    %c0_4 = arith.constant 0 : index
    %3 = vector.load %arg2[%c0_3, %c0_4] : memref<245x128xf32, #tpu.memory_space<vmem>>, vector<245x128xf32>
    tpu.vector_store %arg2[%c0_3, %c0_4], %2 {strides = array<i32>} : memref<245x128xf32, #tpu.memory_space<vmem>>, vector<245x128xf32>,
    return
  }
}

</mosaic_0001>

<llo_original>
// kernel: tpu_custom_call.1
$region0: #{tpu_custom_call.1}
  #allocation0 [shape = 'u32[]', space=smem, size = 0x4, offset = 0x4, fixed_abs, tag = 'smem constant byte address 0x4 - core index']
  #allocation1 [shape = 'u32[144,128]{1,0:T(1,128)}', space=vmem, size = 0x12000, scoped, tag = 'internal scratch']
  %s0 = inlined_call_operand.hbm [shape: f32[245,128], index: 0, kind: input, shape index: {}, may-alias: {0,2}]
  %s1 = inlined_call_operand.vmem [shape: f32[245,128], index: 1, kind: input, shape index: {}]
  %s2 = inlined_call_operand.hbm [shape: f32[245,128], index: 2, kind: output, shape index: {}, may-alias: {0,2}]
  %s3 = sld [smem:[#allocation0]]
  $region22: #{tpu_custom_call.1} parent=0
    _
  %s5 = ssub.s32 1, %s3
  %s6 = scalar_select 0, %s5, %s3
  $region1: #{tpu_custom_call.1} parent=0
    #allocation2 [shape = 'u8[126976]{0}', space=vmem, size = 0x1f000, scoped, tag = 'input window, operand 0, single buffered']
    #allocation3 [shape = 's32[1]{0}', space=sflag, size = 0x4, scoped, tag = 'scoped memory for tpu_custom_call.1']
    #allocation4 [shape = 's32[1]{0}', space=sflag, size = 0x4, scoped, tag = 'scoped memory for tpu_custom_call.1']
    #allocation5 [shape = 'u8[126976]{0}', space=vmem, size = 0x1f000, scoped, tag = 'output window, operand 0, single buffered']
    %7 = vsyncpa [#allocation3], 0
    %8 = vsyncpa [#allocation4], 0
    // Predicated region
    $region2: #{tpu_custom_call.1} parent=1 // pred_check
      _
    $region3: #{tpu_custom_call.1} parent=1 // pred_check_branch
      %10 = sbr.rel (0) target = $region5
    $region4: #{tpu_custom_call.1} parent=1 // pred_region
      %s12 = ssub.s32 3968, 3968
      %13 = vsyncadd [#allocation3], %s12
      %s14 = sshll.u32 [#allocation2], 4
      %s15 = int_to_ptr.vmem [resolvable:$true] %s14
      %20 = dma.hbm_to_vmem [thread:$0]  %s0, 3968, %s15, [#allocation3], 128, 128, 8
    $region5: #{tpu_custom_call.1} parent=1 // pred_fallthru
      _
    // Predicated region
    $region6: #{tpu_custom_call.1} parent=1 // pred_check
      _
    $region7: #{tpu_custom_call.1} parent=1 // pred_check_branch
      %22 = sbr.rel (0) target = $region9
    $region8: #{tpu_custom_call.1} parent=1 // pred_region
      _
    $region9: #{tpu_custom_call.1} parent=1 // pred_fallthru
      _
    // Predicated region
    $region10: #{tpu_custom_call.1} parent=1 // pred_check
      _
    $region11: #{tpu_custom_call.1} parent=1 // pred_check_branch
      %24 = sbr.rel (0) target = $region13
    $region12: #{tpu_custom_call.1} parent=1 // pred_region
      %25 = dma.done [#allocation3], 3968
    $region13: #{tpu_custom_call.1} parent=1 // pred_fallthru
      _
    %v26 = vld [vmem:[#allocation2] sm:$0xff]
    %v27 = vld [vmem:[#allocation2 + $0x8] sm:$0xff]
    %v28 = vld [vmem:[#allocation2 + $0x10] sm:$0xff]
    %v29 = vld [vmem:[#allocation2 + $0x18] sm:$0xff]
    %v30 = vld [vmem:[#allocation2 + $0x20] sm:$0xff]
    %v31 = vld [vmem:[#allocation2 + $0x28] sm:$0xff]
    %v32 = vld [vmem:[#allocation2 + $0x30] sm:$0xff]
    %v33 = vld [vmem:[#allocation2 + $0x38] sm:$0xff]
    %v34 = vld [vmem:[#allocation2 + $0x40] sm:$0xff]
    %v35 = vld [vmem:[#allocation2 + $0x48] sm:$0xff]
    %v36 = vld [vmem:[#allocation2 + $0x50] sm:$0xff]
    %v37 = vld [vmem:[#allocation2 + $0x58] sm:$0xff]
    %v38 = vld [vmem:[#allocation2 + $0x60] sm:$0xff]
    %v39 = vld [vmem:[#allocation2 + $0x68] sm:$0xff]
    %v40 = vld [vmem:[#allocation2 + $0x70] sm:$0xff]
    %v41 = vld [vmem:[#allocation2 + $0x78] sm:$0xff]
    %v42 = vld [vmem:[#allocation2 + $0x80] sm:$0xff]
    %v43 = vld [vmem:[#allocation2 + $0x88] sm:$0xff]
    %v44 = vld [vmem:[#allocation2 + $0x90] sm:$0xff]
    %v45 = vld [vmem:[#allocation2 + $0x98] sm:$0xff]
    %v46 = vld [vmem:[#allocation2 + $0xa0] sm:$0xff]
    %v47 = vld [vmem:[#allocation2 + $0xa8] sm:$0xff]
    %v48 = vld [vmem:[#allocation2 + $0xb0] sm:$0xff]
    %v49 = vld [vmem:[#allocation2 + $0xb8] sm:$0xff]
    %v50 = vld [vmem:[#allocation2 + $0xc0] sm:$0xff]
    %v51 = vld [vmem:[#allocation2 + $0xc8] sm:$0xff]
    %v52 = vld [vmem:[#allocation2 + $0xd0] sm:$0xff]
    %v53 = vld [vmem:[#allocation2 + $0xd8] sm:$0xff]
    %v54 = vld [vmem:[#allocation2 + $0xe0] sm:$0xff]
    %v55 = vld [vmem:[#allocation2 + $0xe8] sm:$0xff]
    %v56 = vld [vmem:[#allocation2 + $0xf0] sm:$0x1f]
    %v57 = vld [vmem:[%s1] sm:$0xff]
    %v58 = vld [vmem:[%s1 + $0x8] sm:$0xff]
    %v59 = vld [vmem:[%s1 + $0x10] sm:$0xff]
    %v60 = vld [vmem:[%s1 + $0x18] sm:$0xff]
    %v61 = vld [vmem:[%s1 + $0x20] sm:$0xff]
    %v62 = vld [vmem:[%s1 + $0x28] sm:$0xff]
    %v63 = vld [vmem:[%s1 + $0x30] sm:$0xff]
    %v64 = vld [vmem:[%s1 + $0x38] sm:$0xff]
    %v65 = vld [vmem:[%s1 + $0x40] sm:$0xff]
    %v66 = vld [vmem:[%s1 + $0x48] sm:$0xff]
    %v67 = vld [vmem:[%s1 + $0x50] sm:$0xff]
    %v68 = vld [vmem:[%s1 + $0x58] sm:$0xff]
    %v69 = vld [vmem:[%s1 + $0x60] sm:$0xff]
    %v70 = vld [vmem:[%s1 + $0x68] sm:$0xff]
    %v71 = vld [vmem:[%s1 + $0x70] sm:$0xff]
    %v72 = vld [vmem:[%s1 + $0x78] sm:$0xff]
    %v73 = vld [vmem:[%s1 + $0x80] sm:$0xff]
    %v74 = vld [vmem:[%s1 + $0x88] sm:$0xff]
    %v75 = vld [vmem:[%s1 + $0x90] sm:$0xff]
    %v76 = vld [vmem:[%s1 + $0x98] sm:$0xff]
    %v77 = vld [vmem:[%s1 + $0xa0] sm:$0xff]
    %v78 = vld [vmem:[%s1 + $0xa8] sm:$0xff]
    %v79 = vld [vmem:[%s1 + $0xb0] sm:$0xff]
    %v80 = vld [vmem:[%s1 + $0xb8] sm:$0xff]
    %v81 = vld [vmem:[%s1 + $0xc0] sm:$0xff]
    %v82 = vld [vmem:[%s1 + $0xc8] sm:$0xff]
    %v83 = vld [vmem:[%s1 + $0xd0] sm:$0xff]
    %v84 = vld [vmem:[%s1 + $0xd8] sm:$0xff]
    %v85 = vld [vmem:[%s1 + $0xe0] sm:$0xff]
    %v86 = vld [vmem:[%s1 + $0xe8] sm:$0xff]
    %v87 = vld [vmem:[%s1 + $0xf0] sm:$0x1f]
    %v88 = vadd.f32 %v26, %v57
    %v89 = vadd.f32 %v27, %v58
    %v90 = vadd.f32 %v28, %v59
    %v91 = vadd.f32 %v29, %v60
    %v92 = vadd.f32 %v30, %v61
    %v93 = vadd.f32 %v31, %v62
    %v94 = vadd.f32 %v32, %v63
    %v95 = vadd.f32 %v33, %v64
    %v96 = vadd.f32 %v34, %v65
    %v97 = vadd.f32 %v35, %v66
    %v98 = vadd.f32 %v36, %v67
    %v99 = vadd.f32 %v37, %v68
    %v100 = vadd.f32 %v38, %v69
    %v101 = vadd.f32 %v39, %v70
    %v102 = vadd.f32 %v40, %v71
    %v103 = vadd.f32 %v41, %v72
    %v104 = vadd.f32 %v42, %v73
    %v105 = vadd.f32 %v43, %v74
    %v106 = vadd.f32 %v44, %v75
    %v107 = vadd.f32 %v45, %v76
    %v108 = vadd.f32 %v46, %v77
    %v109 = vadd.f32 %v47, %v78
    %v110 = vadd.f32 %v48, %v79
    %v111 = vadd.f32 %v49, %v80
    %v112 = vadd.f32 %v50, %v81
    %v113 = vadd.f32 %v51, %v82
    %v114 = vadd.f32 %v52, %v83
    %v115 = vadd.f32 %v53, %v84
    %v116 = vadd.f32 %v54, %v85
    %v117 = vadd.f32 %v55, %v86
    %v118 = vadd.f32 %v56, %v87
    %119 = vst [vmem:[#allocation5] sm:$0xff] %v88
    %120 = vst [vmem:[#allocation5 + $0x8] sm:$0xff] %v89
    %121 = vst [vmem:[#allocation5 + $0x10] sm:$0xff] %v90
    %122 = vst [vmem:[#allocation5 + $0x18] sm:$0xff] %v91
    %123 = vst [vmem:[#allocation5 + $0x20] sm:$0xff] %v92
    %124 = vst [vmem:[#allocation5 + $0x28] sm:$0xff] %v93
    %125 = vst [vmem:[#allocation5 + $0x30] sm:$0xff] %v94
    %126 = vst [vmem:[#allocation5 + $0x38] sm:$0xff] %v95
    %127 = vst [vmem:[#allocation5 + $0x40] sm:$0xff] %v96
    %128 = vst [vmem:[#allocation5 + $0x48] sm:$0xff] %v97
    %129 = vst [vmem:[#allocation5 + $0x50] sm:$0xff] %v98
    %130 = vst [vmem:[#allocation5 + $0x58] sm:$0xff] %v99
    %131 = vst [vmem:[#allocation5 + $0x60] sm:$0xff] %v100
    %132 = vst [vmem:[#allocation5 + $0x68] sm:$0xff] %v101
    %133 = vst [vmem:[#allocation5 + $0x70] sm:$0xff] %v102
    %134 = vst [vmem:[#allocation5 + $0x78] sm:$0xff] %v103
    %135 = vst [vmem:[#allocation5 + $0x80] sm:$0xff] %v104
    %136 = vst [vmem:[#allocation5 + $0x88] sm:$0xff] %v105
    %137 = vst [vmem:[#allocation5 + $0x90] sm:$0xff] %v106
    %138 = vst [vmem:[#allocation5 + $0x98] sm:$0xff] %v107
    %139 = vst [vmem:[#allocation5 + $0xa0] sm:$0xff] %v108
    %140 = vst [vmem:[#allocation5 + $0xa8] sm:$0xff] %v109
    %141 = vst [vmem:[#allocation5 + $0xb0] sm:$0xff] %v110
    %142 = vst [vmem:[#allocation5 + $0xb8] sm:$0xff] %v111
    %143 = vst [vmem:[#allocation5 + $0xc0] sm:$0xff] %v112
    %144 = vst [vmem:[#allocation5 + $0xc8] sm:$0xff] %v113
    %145 = vst [vmem:[#allocation5 + $0xd0] sm:$0xff] %v114
    %146 = vst [vmem:[#allocation5 + $0xd8] sm:$0xff] %v115
    %147 = vst [vmem:[#allocation5 + $0xe0] sm:$0xff] %v116
    %148 = vst [vmem:[#allocation5 + $0xe8] sm:$0xff] %v117
    %149 = vst [vmem:[#allocation5 + $0xf0] sm:$0x1f] %v118
    // Predicated region
    $region14: #{tpu_custom_call.1} parent=1 // pred_check
      _
    $region15: #{tpu_custom_call.1} parent=1 // pred_check_branch
      %151 = sbr.rel (0) target = $region17
    $region16: #{tpu_custom_call.1} parent=1 // pred_region
      %s153 = ssub.s32 3968, 3968
      %154 = vsyncadd [#allocation4], %s153
      %s155 = sshll.u32 [#allocation5], 4
      %s156 = int_to_ptr.vmem [resolvable:$true] %s155
      %161 = dma.vmem_to_hbm [thread:$0]  %s156, 3968, %s2, [#allocation4], 128, 128, 8
    $region17: #{tpu_custom_call.1} parent=1 // pred_fallthru
      _
    // Predicated region
    $region18: #{tpu_custom_call.1} parent=1 // pred_check
      _
    $region19: #{tpu_custom_call.1} parent=1 // pred_check_branch
      %163 = sbr.rel (0) target = $region21
    $region20: #{tpu_custom_call.1} parent=1 // pred_region
      %164 = dma.done [#allocation4], 3968
    $region21: #{tpu_custom_call.1} parent=1 // pred_fallthru
      _
    %165 = vsyncpa [#allocation3], 1
    %166 = vsyncpa [#allocation4], 1

</llo_original>
